<compile_context>
chip_gen: v5e
topology: v5e:2x2
jax: 0.10.0
libtpu: 0.0.40
codegen_flags: <defaults>
</compile_context>

<pallas_src>
import functools
from collections import defaultdict

import jax
import jax.numpy as jnp
import numpy as np
from jax.experimental import pallas as pl
from jax.experimental.pallas import tpu as pltpu


# ----------------------------------------------------------------------------
# Generation-aware VMEM budget
# ----------------------------------------------------------------------------
@functools.lru_cache(maxsize=None)
def _vmem_limit_bytes() -> int:
    """~3/4 of physical VMEM: 96 MiB on v5e/v6e (128 MiB), 48 MiB on v7x (64 MiB)."""
    cap = 64 * 1024 * 1024
    try:
        cap = int(pltpu.get_tpu_info().vmem_capacity_bytes)
    except Exception:
        pass
    return min((cap * 3) // 4, 96 * 1024 * 1024)


def _choose_c_tile(t_rows: int, c: int, itemsize: int, budget_bytes: int) -> int:
    """Largest lane-dense (multiple-of-128) divisor of C whose full-T block fits
    the per-block budget; prefers >=2 grid steps along C (v7x megacore) as long
    as that does not collapse the tile below 512 lanes / half the best size."""
    if c % 128 != 0:
        # Full-C block (allowed: block equals the full array dim).
        # TODO(synk): if t_rows * c * itemsize exceeds the budget here, halo-based
        # T tiling would be needed; not implemented.
        return c
    divisors = sorted((d for d in range(128, c + 1, 128) if c % d == 0), reverse=True)
    fitting = [d for d in divisors if t_rows * d * itemsize <= budget_bytes]
    if not fitting:
        # TODO(synk): very large T — even 128-lane full-T blocks blow the budget;
        # halo-based T tiling (previous-tile window offset by -delay) is required
        # to scale to such sequences.
        return 128
    best = fitting[0]
    if c // best < 2:
        for d in fitting[1:]:
            if d >= 512 or 2 * d >= best:
                best = d
                break
    return best


# ----------------------------------------------------------------------------
# Kernel: one (T, tc) block per column, N columns per grid step
# ----------------------------------------------------------------------------
def _speed_group_kernel(*refs, delay: int, n_cols: int):
    """refs = (x_0..x_{n-1}, o_0..o_{n-1}); each (T, tc) in VMEM.
    o[t] = x[t] - x[t - delay] for t >= delay, 0 otherwise."""
    for idx in range(n_cols):
        x_ref = refs[idx]
        o_ref = refs[n_cols + idx]
        tc = x_ref.shape[-1]
        x = x_ref[...]                                    # [T, tc]
        # rolled[t] = x[(t - delay) % T]  (XLU sublane rotation; wrapped rows
        # t < delay are never stored — those rows get zeros below).
        d = x - pltpu.roll(x, shift=delay, axis=0)
        # Each output row written exactly once (no full store + masked overwrite).
        o_ref[0:delay, :] = jnp.zeros((delay, tc), dtype=o_ref.dtype)
        o_ref[delay:, :] = d[delay:, :]


def _run_speed_group(arrays, delay: int):
    """One fused pallas_call for a list of same-shape/same-dtype [T, C] columns."""
    t, c = arrays[0].shape
    dtype = arrays[0].dtype
    n = len(arrays)
    assert 1 <= delay < t, f"delay={delay} must satisfy 1 <= delay < T={t}"
    itemsize = np.dtype(dtype).itemsize

    vmem_limit = _vmem_limit_bytes()
    # Per grid step: 2 buffers x (n inputs + n outputs) x block_bytes <= limit/2.
    budget = max(vmem_limit // (8 * n), 512 * 1024)
    tc = _choose_c_tile(t, c, itemsize, budget)
    grid = (c // tc,)

    spec = pl.BlockSpec((t, tc), lambda j: (0, j))
    kernel = functools.partial(_speed_group_kernel, delay=delay, n_cols=n)
    cost = pl.CostEstimate(
        flops=n * t * c,
        transcendentals=0,
        bytes_accessed=2 * n * t * c * itemsize,
    )
    outs = pl.pallas_call(
        kernel,
        out_shape=tuple(jax.ShapeDtypeStruct((t, c), dtype) for _ in range(n)),
        grid=grid,
        in_specs=[spec] * n,
        out_specs=tuple(spec for _ in range(n)),
        compiler_params=pltpu.CompilerParams(
            dimension_semantics=("parallel",),
            vmem_limit_bytes=vmem_limit,
        ),
        cost_estimate=cost,
    )(*arrays)
    return list(outs)


def add_speed(data: dict, delay: int = 20) -> dict:
    """AddSpeed over a dict of [T, C] columns: one fused pallas_call per
    (shape, dtype) group, columns passed as separate refs (no stack/unstack)."""
    out = dict(data)
    groups = defaultdict(list)
    for col, d in data.items():
        assert d.ndim == 2, f"{col}: expected [T, C], got {d.shape}"
        groups[(tuple(d.shape), str(jnp.dtype(d.dtype)))].append(col)
    for cols in groups.values():
        results = _run_speed_group([data[c] for c in cols], delay)
        for col, r in zip(cols, results):
            out[f"{col}_v"] = r
    return out


# ----------------------------------------------------------------------------
# Gap splitting (host / data-dependent) + per-block transform
# ----------------------------------------------------------------------------
def _find_gaps(t_np: np.ndarray) -> np.ndarray:
    d = np.diff(t_np, axis=0)
    return np.where(np.logical_or(d <= 0, d > 0.9))[0]


def _bucket_len(n: int, minimum: int = 32) -> int:
    b = minimum
    while b < n:
        b *= 2
    return b


def add_speed_block(block: dict, delay: int) -> dict:
    """AddSpeed for one contiguous gap block. Block lengths are padded up to
    power-of-two buckets so repeated (gap-dependent) lengths reuse the same
    compiled kernel instead of triggering a fresh trace+compile each time;
    padded rows never influence rows < T and are sliced off afterwards."""
    t = int(next(iter(block.values())).shape[0])
    if t <= delay:
        # Every row has t < delay -> speed is all zeros (length T, matching the
        # input block; the literal reference concat would emit `delay` rows).
        out = dict(block)
        for k, v in block.items():
            out[f"{k}_v"] = jnp.zeros_like(v)
        return out
    tb = _bucket_len(t)
    if tb == t:
        return add_speed(block, delay)
    padded = {k: jnp.pad(v, ((0, tb - t), (0, 0))) for k, v in block.items()}
    res = add_speed(padded, delay)
    out = dict(block)
    for k in block:
        out[f"{k}_v"] = res[f"{k}_v"][:t]
    return out


def find_gaps_and_transform(data: dict, delay: int = 20, name: str = "input") -> dict:
    """Mirror of FindGapsAndTransform.forward with AddSpeed(delay) as the
    per-contiguous-block transform (make_augs is unspecified in the spec)."""
    # TODO(synk): gap detection + ragged per-block splitting is data-dependent
    # (dynamic shapes), so it runs on the host; each block's transform uses the
    # fused Pallas kernel above.
    t_np = np.asarray(data["t"])
    gaps = [-1, *[int(g) for g in _find_gaps(t_np)], int(t_np.shape[0])]
    ret = defaultdict(list)
    for g0, g1 in zip(gaps, gaps[1:]):
        lo, hi = g0 + 1, g1 + 1
        block = {k: v[lo:hi] for k, v in data.items()}
        if int(block["t"].shape[0]) <= 0:
            continue
        block_out = add_speed_block(block, delay)
        for k, v in block_out.items():
            ret[k].append(v)
        # NOTE: the reference collects only the last block (indentation bug);
        # the intended per-block collection is implemented here.
    for k in data.keys():
        if len(ret[k]) == 0:
            raise Exception(f"{name}: no contiguous series found for column {k}")
    return dict(ret)


# ----------------------------------------------------------------------------
# Reference + self-test
# ----------------------------------------------------------------------------
def _reference_speed(d: jax.Array, delay: int) -> jax.Array:
    zeros = jnp.zeros((delay,) + d.shape[1:], dtype=d.dtype)
    return jnp.concatenate([zeros, d[delay:] - d[:-delay]], axis=0)


if __name__ == "__main__":
    key = jax.random.PRNGKey(0)
    k1, k2 = jax.random.split(key)

    T, C, delay = 96, 128, 20

    # time column increasing by 0.01 with one jump (> 0.9) after row 47,
    # i.e. two contiguous blocks: rows [0:48) and [48:96).
    t_np = (np.arange(T, dtype=np.float32) * 0.01).reshape(T, 1)
    t_np[48:] += 10.0
    data = {
        "t": jnp.asarray(t_np),
        "price": jax.random.normal(k1, (T, C), dtype=jnp.float32),
        "volume": jax.random.normal(k2, (T, C), dtype=jnp.float32),
    }

    # --- fused AddSpeed kernel on the full arrays ---------------------------
    out = add_speed(data, delay=delay)
    jax.block_until_ready(out)
    for col, d in data.items():
        np.testing.assert_allclose(
            np.asarray(out[f"{col}_v"]),
            np.asarray(_reference_speed(d, delay)),
            rtol=1e-6, atol=1e-6,
        )

    # --- full FindGapsAndTransform mirror ------------------------------------
    res = find_gaps_and_transform(data, delay=delay)
    jax.block_until_ready(res)
    blocks = [(0, 48), (48, 96)]
    for col, d in data.items():
        assert len(res[f"{col}_v"]) == len(blocks)
        for bi, (lo, hi) in enumerate(blocks):
            np.testing.assert_allclose(
                np.asarray(res[f"{col}_v"][bi]),
                np.asarray(_reference_speed(d[lo:hi], delay)),
                rtol=1e-6, atol=1e-6,
            )

    print("KERNEL_OK")
</pallas_src>

<mosaic_0001>
module attributes {stable_mosaic.version = 11 : i64} {
  func.func @_speed_group_kernel(%arg0: i32, %arg1: memref<96x1xf32, #tpu.memory_space<vmem>>, %arg2: memref<96x1xf32, #tpu.memory_space<vmem>>) attributes {dimension_semantics = [#tpu.dimension_semantics<parallel>], iteration_bounds = array<i64: 1>, scalar_prefetch = 0 : i64, scratch_operands = 0 : i64, tpu.core_type = #tpu.core_type<tc>, window_params = [{transform_indices = @transform_0, window_bounds = array<i64: 96, 1>}, {transform_indices = @transform_1, window_bounds = array<i64: 96, 1>}]} {
    %c0 = arith.constant 0 : index
    %c0_0 = arith.constant 0 : index
    %0 = vector.load %arg1[%c0, %c0_0] : memref<96x1xf32, #tpu.memory_space<vmem>>, vector<96x1xf32>
    %c20_i32 = arith.constant 20 : i32
    %1 = tpu.dynamic_rotate %0 by %c20_i32 dim 0 : vector<96x1xf32>, i32 -> vector<96x1xf32>
    %2 = arith.subf %0, %1 : vector<96x1xf32>
    %cst = arith.constant 0.000000e+00 : f32
    %3 = vector.broadcast %cst : f32 to vector<20x1xf32>
    %c0_1 = arith.constant 0 : index
    %c0_2 = arith.constant 0 : index
    %4 = vector.load %arg2[%c0_1, %c0_2] : memref<96x1xf32, #tpu.memory_space<vmem>>, vector<20x1xf32>
    tpu.vector_store %arg2[%c0_1, %c0_2], %3 {strides = array<i32>} : memref<96x1xf32, #tpu.memory_space<vmem>>, vector<20x1xf32>,
    %5 = vector.extract_strided_slice %2 {offsets = [20, 0], sizes = [76, 1], strides = [1, 1]} : vector<96x1xf32> to vector<76x1xf32>
    %c20 = arith.constant 20 : index
    %c0_3 = arith.constant 0 : index
    %6 = vector.load %arg2[%c20, %c0_3] : memref<96x1xf32, #tpu.memory_space<vmem>>, vector<76x1xf32>
    tpu.vector_store %arg2[%c20, %c0_3], %5 {strides = array<i32>} : memref<96x1xf32, #tpu.memory_space<vmem>>, vector<76x1xf32>,
    return
  }
  func.func @transform_0(%arg0: i32) -> (i32, i32) {
    %c0_i32 = arith.constant 0 : i32
    %c0_i32_0 = arith.constant 0 : i32
    return %c0_i32, %arg0 : i32, i32
  }
  func.func @transform_1(%arg0: i32) -> (i32, i32) {
    %c0_i32 = arith.constant 0 : i32
    %c0_i32_0 = arith.constant 0 : i32
    return %c0_i32, %arg0 : i32, i32
  }
}

</mosaic_0001>

<llo_original>
// kernel: tpu_custom_call.1
$region0: #{tpu_custom_call.1}
  #allocation0 [shape = 'u32[]', space=smem, size = 0x4, offset = 0x4, fixed_abs, tag = 'smem constant byte address 0x4 - core index']
  #allocation1 [shape = 'u32[72,128]{1,0:T(1,128)}', space=vmem, size = 0x9000, scoped, tag = 'internal scratch']
  %s0 = inlined_call_operand.vmem [shape: f32[96,1], index: 0, kind: input, shape index: {}]
  %s1 = inlined_call_operand.vmem [shape: f32[96,1], index: 1, kind: output, shape index: {}]
  %s2 = sld [smem:[#allocation0]]
  $region14: #{tpu_custom_call.1} parent=0
    _
  %s4 = ssub.s32 1, %s2
  %s5 = scalar_select 0, %s4, %s2
  // Predicated region
  $region2: #{tpu_custom_call.1} parent=0 // pred_check
    _
  $region3: #{tpu_custom_call.1} parent=0 // pred_check_branch
    %7 = sbr.rel (0) target = $region5
  $region4: #{tpu_custom_call.1} parent=0 // pred_region
    _
  $region5: #{tpu_custom_call.1} parent=0 // pred_fallthru
    _
  %v8 = vld [vmem:[%s0] sm:$0xff]
  %v9 = vld [vmem:[%s0 + $0x8] sm:$0xff]
  %v10 = vld [vmem:[%s0 + $0x10] sm:$0xff]
  %v11 = vld [vmem:[%s0 + $0x18] sm:$0xff]
  %v12 = vld [vmem:[%s0 + $0x20] sm:$0xff]
  %v13 = vld [vmem:[%s0 + $0x28] sm:$0xff]
  %v14 = vld [vmem:[%s0 + $0x30] sm:$0xff]
  %v15 = vld [vmem:[%s0 + $0x38] sm:$0xff]
  %v16 = vld [vmem:[%s0 + $0x40] sm:$0xff]
  %v17 = vld [vmem:[%s0 + $0x48] sm:$0xff]
  %v18 = vld [vmem:[%s0 + $0x50] sm:$0xff]
  %v19 = vld [vmem:[%s0 + $0x58] sm:$0xff]
  %v20 = vrot.slane %v8, 4
  %v21 = vrot.slane %v9, 4
  %v22 = vrot.slane %v10, 4
  %v23 = vrot.slane %v11, 4
  %v24 = vrot.slane %v12, 4
  %v25 = vrot.slane %v13, 4
  %v26 = vrot.slane %v14, 4
  %v27 = vrot.slane %v15, 4
  %v28 = vrot.slane %v16, 4
  %v29 = vrot.slane %v17, 4
  %v30 = vrot.slane %v19, 4
  %v31 = vlaneseq
  %v32 = vshrl.u32 %v31, 7
  %vm33 = vcmp.lt.s32.totalorder %v32, 4
  %v34 = vsel %vm33, %v28, %v29
  %v35 = vsel %vm33, %v27, %v28
  %v36 = vsel %vm33, %v26, %v27
  %v37 = vsel %vm33, %v25, %v26
  %v38 = vsel %vm33, %v24, %v25
  %v39 = vsel %vm33, %v23, %v24
  %v40 = vsel %vm33, %v22, %v23
  %v41 = vsel %vm33, %v21, %v22
  %v42 = vsel %vm33, %v20, %v21
  %v43 = vsel %vm33, %v30, %v20
  %v44 = vsub.f32 %v10, %v43
  %v45 = vsub.f32 %v11, %v42
  %v46 = vsub.f32 %v12, %v41
  %v47 = vsub.f32 %v13, %v40
  %v48 = vsub.f32 %v14, %v39
  %v49 = vsub.f32 %v15, %v38
  %v50 = vsub.f32 %v16, %v37
  %v51 = vsub.f32 %v17, %v36
  %v52 = vsub.f32 %v18, %v35
  %v53 = vsub.f32 %v19, %v34
  %vm54 = vcmask 7168
  %55 = vst.msk [vmem:[%s1] sm:$0xff] %vm54, 0.0
  %56 = vst.msk [vmem:[%s1 + $0x8] sm:$0xff] %vm54, 0.0
  %vm57 = vcmask 3072
  %58 = vst.msk [vmem:[%s1 + $0x10] sm:$0xf] %vm57, 0.0
  %vm59 = vcmask 7172
  %60 = vst.msk [vmem:[%s1 + $0x10] sm:$0xf0] %vm59, %v44
  %61 = vst.msk [vmem:[%s1 + $0x18] sm:$0xff] %vm54, %v45
  %62 = vst.msk [vmem:[%s1 + $0x20] sm:$0xff] %vm54, %v46
  %63 = vst.msk [vmem:[%s1 + $0x28] sm:$0xff] %vm54, %v47
  %64 = vst.msk [vmem:[%s1 + $0x30] sm:$0xff] %vm54, %v48
  %65 = vst.msk [vmem:[%s1 + $0x38] sm:$0xff] %vm54, %v49
  %66 = vst.msk [vmem:[%s1 + $0x40] sm:$0xff] %vm54, %v50
  %67 = vst.msk [vmem:[%s1 + $0x48] sm:$0xff] %vm54, %v51
  %68 = vst.msk [vmem:[%s1 + $0x50] sm:$0xff] %vm54, %v52
  %69 = vst.msk [vmem:[%s1 + $0x58] sm:$0xff] %vm54, %v53
  // Predicated region
  $region6: #{tpu_custom_call.1} parent=0 // pred_check
    _
  $region7: #{tpu_custom_call.1} parent=0 // pred_check_branch
    %71 = sbr.rel (0) target = $region9
  $region8: #{tpu_custom_call.1} parent=0 // pred_region
    _
  $region9: #{tpu_custom_call.1} parent=0 // pred_fallthru
    _
  // Predicated region
  $region10: #{tpu_custom_call.1} parent=0 // pred_check
    _
  $region11: #{tpu_custom_call.1} parent=0 // pred_check_branch
    %73 = sbr.rel (0) target = $region13
  $region12: #{tpu_custom_call.1} parent=0 // pred_region
    _
  $region13: #{tpu_custom_call.1} parent=0 // pred_fallthru
    _

</llo_original>
